<compile_context>
chip_gen: v6e
topology: v6e:2x2x1
jax: 0.10.0
libtpu: 0.0.40
codegen_flags: <defaults>
</compile_context>

<pallas_src>
import functools

import jax
import jax.numpy as jnp
from jax.experimental import pallas as pl
from jax.experimental.pallas import tpu as pltpu


def _round_up(x: int, m: int) -> int:
    return ((x + m - 1) // m) * m


def _cdiv(a: int, b: int) -> int:
    return (a + b - 1) // b


# ----------------------------------------------------------------------------
# Kernels
# ----------------------------------------------------------------------------
def _mlp_kernel_single(x_ref, w0_ref, b_ref, o_ref, *, compute_dtype):
    """num_layers == 1: one Linear, no ReLU."""
    acc = jnp.dot(x_ref[...].astype(compute_dtype), w0_ref[...],
                  preferred_element_type=jnp.float32)
    o_ref[...] = (acc + b_ref[0:1, :]).astype(o_ref.dtype)


def _mlp_kernel_resident(x_ref, w0_ref, w_rest_ref, b_ref, o_ref, h_ref, *,
                         num_layers, compute_dtype):
    """Fused MLP, all weights resident in VMEM (num_layers >= 2).

    x_ref:      (tm, K_pad)                    input row tile (original dtype)
    w0_ref:     (K_pad, D_pad)                 layer-0 weight (transposed)
    w_rest_ref: (num_layers-1, D_pad, D_pad)   layers 1..L-1 weights (transposed)
    b_ref:      (num_layers, D_pad) f32        all biases
    o_ref:      (tm, D_pad)                    output row tile
    h_ref:      (tm, D_pad) f32 VMEM scratch   activation (never leaves VMEM)
    """
    acc = jnp.dot(x_ref[...].astype(compute_dtype), w0_ref[...],
                  preferred_element_type=jnp.float32)
    h_ref[...] = jnp.maximum(acc + b_ref[0:1, :], 0.0)

    # Layers 1..L-1, statically unrolled (num_layers is a small Python int).
    for l in range(num_layers - 1):
        acc = jnp.dot(h_ref[...].astype(compute_dtype), w_rest_ref[l],
                      preferred_element_type=jnp.float32)
        acc = acc + b_ref[l + 1:l + 2, :]
        if l < num_layers - 2:
            h_ref[...] = jnp.maximum(acc, 0.0)      # hidden: ReLU
        else:
            o_ref[...] = acc.astype(o_ref.dtype)    # last layer: no ReLU


def _mlp_kernel_streamed(x_ref, w0_ref, wl_ref, b_ref, o_ref, h_ref, *,
                         num_layers, compute_dtype):
    """Streamed-weights MLP (num_layers >= 2): grid = (row_tiles, num_layers-1).

    One (1, D_pad, D_pad) hidden/output weight block is DMA'd per layer step;
    the activation persists across the layer axis in VMEM scratch.
    """
    l = pl.program_id(1)

    @pl.when(l == 0)
    def _():
        acc0 = jnp.dot(x_ref[...].astype(compute_dtype), w0_ref[...],
                       preferred_element_type=jnp.float32)
        h_ref[...] = jnp.maximum(acc0 + b_ref[0:1, :], 0.0)

    acc = jnp.dot(h_ref[...].astype(compute_dtype), wl_ref[0],
                  preferred_element_type=jnp.float32)
    acc = acc + b_ref[pl.ds(l + 1, 1), :]

    @pl.when(l < num_layers - 2)
    def _():
        h_ref[...] = jnp.maximum(acc, 0.0)          # hidden: ReLU

    @pl.when(l == num_layers - 2)
    def _():
        o_ref[...] = acc.astype(o_ref.dtype)        # last layer: no ReLU


# ----------------------------------------------------------------------------
# Parameter init / preparation
# ----------------------------------------------------------------------------
def init_predictor_params(key, input_dim, output_dim, num_layers):
    """Deterministic init matching nn.Linear shapes (weights stored (in, out))."""
    params = []
    in_dim = input_dim
    for _ in range(num_layers):
        key, wk, bk = jax.random.split(key, 3)
        bound = 1.0 / jnp.sqrt(in_dim)
        w = jax.random.uniform(wk, (output_dim, in_dim),
                               minval=-bound, maxval=bound, dtype=jnp.float32)
        b = jax.random.uniform(bk, (output_dim,),
                               minval=-bound, maxval=bound, dtype=jnp.float32)
        params.append((w.T, b))  # store transposed: (in, out)
        in_dim = output_dim
    return params


def prepare_predictor_params(params, input_dim, output_dim, use_bf16=True):
    """One-time zero-pad to lane-dense (multiple-of-128) dims and stack layers.

    Weights are stored in bf16 when use_bf16 (f32 accumulation happens in the
    kernel); biases stay f32.
    """
    num_layers = len(params)
    k_pad = _round_up(max(input_dim, 1), 128)
    d_pad = _round_up(max(output_dim, 1), 128)
    w_dtype = jnp.bfloat16 if use_bf16 else jnp.float32

    w0_t, b0 = params[0]
    w0 = jnp.zeros((k_pad, d_pad), w_dtype)
    w0 = w0.at[:input_dim, :output_dim].set(w0_t.astype(w_dtype))
    b_all = jnp.zeros((num_layers, d_pad), jnp.float32)
    b_all = b_all.at[0, :output_dim].set(b0)

    w_rest = None
    if num_layers > 1:
        w_rest = jnp.zeros((num_layers - 1, d_pad, d_pad), w_dtype)
        for l in range(1, num_layers):
            w_t, b = params[l]
            w_rest = w_rest.at[l - 1, :output_dim, :output_dim].set(
                w_t.astype(w_dtype))
            b_all = b_all.at[l, :output_dim].set(b)

    return dict(w0=w0, w_rest=w_rest, b=b_all,
                input_dim=input_dim, output_dim=output_dim,
                k_pad=k_pad, d_pad=d_pad, num_layers=num_layers,
                w_dtype=w_dtype)


# ----------------------------------------------------------------------------
# Forward pass
# ----------------------------------------------------------------------------
def predictor_forward(prepared, embedding, force_streaming=False):
    """Pallas equivalent of Predictor.forward (single fused kernel)."""
    M, K = embedding.shape
    assert K == prepared["input_dim"]
    num_layers = prepared["num_layers"]
    k_pad, d_pad = prepared["k_pad"], prepared["d_pad"]
    w_dtype = prepared["w_dtype"]
    out_dtype = embedding.dtype

    # --- Generation-aware VMEM budget (128 MiB v5e/v6e, 64 MiB v7x). ---------
    try:
        vmem_cap = int(pltpu.get_tpu_info().vmem_capacity_bytes)
    except Exception:
        vmem_cap = 64 * 1024 * 1024          # conservative fallback
    budget = int(vmem_cap * 0.70)            # bytes we explicitly account for
    vmem_limit = int(vmem_cap * 0.90)        # scoped limit handed to Mosaic

    wbytes = jnp.dtype(w_dtype).itemsize
    xbytes = jnp.dtype(embedding.dtype).itemsize
    n_hidden = max(num_layers - 1, 0)
    w0_bytes = k_pad * d_pad * wbytes
    wrest_bytes = n_hidden * d_pad * d_pad * wbytes
    b_bytes = num_layers * d_pad * 4
    # BlockSpec inputs are double-buffered even with a constant index_map -> 2x.
    resident_bytes = 2 * (w0_bytes + wrest_bytes + b_bytes)
    streamed_bytes = 2 * (w0_bytes + d_pad * d_pad * wbytes + b_bytes)
    # Per output row: double-buffered x tile + double-buffered out tile + f32 h.
    per_row = 2 * k_pad * xbytes + 2 * d_pad * jnp.dtype(out_dtype).itemsize \
        + d_pad * 4

    use_streaming = bool(force_streaming) and num_layers > 1
    avail = budget - resident_bytes
    if avail < 8 * per_row and num_layers > 1:
        use_streaming = True
    if use_streaming:
        avail = budget - streamed_bytes
    if avail < 8 * per_row:
        # TODO(synk): chunk D_pad (output dimension) when a single layer's
        # weights alone exceed the VMEM budget.
        raise ValueError("Predictor weights too large for VMEM even with "
                         "per-layer weight streaming.")

    # --- Row tile: balanced, multiple of 8; >=2 tiles when possible (v7x). ---
    tm_max = min(512, max(8, (avail // per_row) // 8 * 8))
    m8 = _round_up(M, 8)
    num_tiles = _cdiv(m8, tm_max)
    if num_tiles == 1 and m8 >= 16:
        num_tiles = 2                         # let both v7x TensorCores work
    tm = _round_up(_cdiv(m8, num_tiles), 8)
    m_pad = num_tiles * tm

    # --- Pad input only when needed (single op, original dtype kept). --------
    x = embedding
    if m_pad != M or k_pad != K:
        x = jnp.pad(x, ((0, m_pad - M), (0, k_pad - K)))

    flops = 2 * m_pad * (k_pad * d_pad + n_hidden * d_pad * d_pad)
    bytes_accessed = (m_pad * k_pad * xbytes
                      + m_pad * d_pad * jnp.dtype(out_dtype).itemsize
                      + w0_bytes + wrest_bytes + b_bytes)
    cost = pl.CostEstimate(flops=flops, transcendentals=0,
                           bytes_accessed=bytes_accessed)

    out_shape = jax.ShapeDtypeStruct((m_pad, d_pad), out_dtype)

    if num_layers == 1:
        kernel = functools.partial(_mlp_kernel_single, compute_dtype=w_dtype)
        out_pad = pl.pallas_call(
            kernel,
            out_shape=out_shape,
            grid_spec=pltpu.PrefetchScalarGridSpec(
                num_scalar_prefetch=0,
                grid=(num_tiles,),
                in_specs=[
                    pl.BlockSpec((tm, k_pad), lambda i: (i, 0)),
                    pl.BlockSpec((k_pad, d_pad), lambda i: (0, 0)),
                    pl.BlockSpec((1, d_pad), lambda i: (0, 0)),
                ],
                out_specs=pl.BlockSpec((tm, d_pad), lambda i: (i, 0)),
            ),
            compiler_params=pltpu.CompilerParams(
                dimension_semantics=("parallel",),
                vmem_limit_bytes=vmem_limit),
            cost_estimate=cost,
        )(x, prepared["w0"], prepared["b"])
    elif not use_streaming:
        kernel = functools.partial(_mlp_kernel_resident,
                                   num_layers=num_layers, compute_dtype=w_dtype)
        out_pad = pl.pallas_call(
            kernel,
            out_shape=out_shape,
            grid_spec=pltpu.PrefetchScalarGridSpec(
                num_scalar_prefetch=0,
                grid=(num_tiles,),
                in_specs=[
                    pl.BlockSpec((tm, k_pad), lambda i: (i, 0)),           # x
                    pl.BlockSpec((k_pad, d_pad), lambda i: (0, 0)),        # W0
                    pl.BlockSpec((num_layers - 1, d_pad, d_pad),
                                 lambda i: (0, 0, 0)),                     # W1..
                    pl.BlockSpec((num_layers, d_pad), lambda i: (0, 0)),   # b
                ],
                out_specs=pl.BlockSpec((tm, d_pad), lambda i: (i, 0)),
                scratch_shapes=[pltpu.VMEM((tm, d_pad), jnp.float32)],
            ),
            compiler_params=pltpu.CompilerParams(
                dimension_semantics=("parallel",),
                vmem_limit_bytes=vmem_limit),
            cost_estimate=cost,
        )(x, prepared["w0"], prepared["w_rest"], prepared["b"])
    else:
        kernel = functools.partial(_mlp_kernel_streamed,
                                   num_layers=num_layers, compute_dtype=w_dtype)
        out_pad = pl.pallas_call(
            kernel,
            out_shape=out_shape,
            grid_spec=pltpu.PrefetchScalarGridSpec(
                num_scalar_prefetch=0,
                grid=(num_tiles, num_layers - 1),
                in_specs=[
                    pl.BlockSpec((tm, k_pad), lambda i, l: (i, 0)),        # x
                    pl.BlockSpec((k_pad, d_pad), lambda i, l: (0, 0)),     # W0
                    pl.BlockSpec((1, d_pad, d_pad),
                                 lambda i, l: (l, 0, 0)),                  # W_l+1
                    pl.BlockSpec((num_layers, d_pad), lambda i, l: (0, 0)),
                ],
                out_specs=pl.BlockSpec((tm, d_pad), lambda i, l: (i, 0)),
                scratch_shapes=[pltpu.VMEM((tm, d_pad), jnp.float32)],
            ),
            compiler_params=pltpu.CompilerParams(
                dimension_semantics=("parallel", "arbitrary"),
                vmem_limit_bytes=vmem_limit),
            cost_estimate=cost,
        )(x, prepared["w0"], prepared["w_rest"], prepared["b"])

    # Strip row / lane padding (no-op slices when nothing was padded).
    return out_pad[:M, :prepared["output_dim"]]


# ----------------------------------------------------------------------------
# Reference (same math as the PyTorch module)
# ----------------------------------------------------------------------------
def predictor_reference(params, x):
    num_layers = len(params)
    h = x
    for layer in range(num_layers - 1):
        w_t, b = params[layer]
        h = jnp.maximum(h @ w_t + b, 0.0)
    w_t, b = params[num_layers - 1]
    return h @ w_t + b


# ----------------------------------------------------------------------------
# Test
# ----------------------------------------------------------------------------
if __name__ == "__main__":
    batch, input_dim, output_dim, num_layers = 8, 32, 32, 3

    key = jax.random.PRNGKey(0)
    key, xk = jax.random.split(key)
    x = jax.random.normal(xk, (batch, input_dim), dtype=jnp.float32)

    params = init_predictor_params(key, input_dim, output_dim, num_layers)
    ref = predictor_reference(params, x)

    # 1) Default path: bf16 weights on the MXU with f32 accumulation.
    prepared_bf16 = prepare_predictor_params(params, input_dim, output_dim,
                                             use_bf16=True)
    out_bf16 = jax.block_until_ready(predictor_forward(prepared_bf16, x))
    assert out_bf16.shape == (batch, output_dim)
    assert jnp.allclose(out_bf16, ref, atol=5e-2, rtol=5e-2)

    # 2) Exact f32 path (weights resident).
    prepared_f32 = prepare_predictor_params(params, input_dim, output_dim,
                                            use_bf16=False)
    out_f32 = jax.block_until_ready(predictor_forward(prepared_f32, x))
    assert out_f32.shape == (batch, output_dim)
    assert jnp.allclose(out_f32, ref, atol=1e-5, rtol=1e-5)

    # 3) Streamed-weights fallback path (forced here at small shapes).
    out_stream = jax.block_until_ready(
        predictor_forward(prepared_f32, x, force_streaming=True))
    assert jnp.allclose(out_stream, ref, atol=1e-5, rtol=1e-5)

    # 4) Degenerate single-layer case.
    params1 = init_predictor_params(jax.random.PRNGKey(1), input_dim,
                                    output_dim, 1)
    prepared1 = prepare_predictor_params(params1, input_dim, output_dim,
                                         use_bf16=False)
    out1 = jax.block_until_ready(predictor_forward(prepared1, x))
    ref1 = predictor_reference(params1, x)
    assert jnp.allclose(out1, ref1, atol=1e-5, rtol=1e-5)

    print("KERNEL_OK")
</pallas_src>

<mosaic_0001>
module attributes {stable_mosaic.version = 11 : i64} {
  func.func @_mlp_kernel_resident(%arg0: i32, %arg1: memref<8x128xf32, #tpu.memory_space<vmem>>, %arg2: memref<128x128xbf16, #tpu.memory_space<vmem>>, %arg3: memref<2x128x128xbf16, #tpu.memory_space<vmem>>, %arg4: memref<3x128xf32, #tpu.memory_space<vmem>>, %arg5: memref<8x128xf32, #tpu.memory_space<vmem>>, %arg6: memref<8x128xf32, #tpu.memory_space<vmem>>) attributes {dimension_semantics = [#tpu.dimension_semantics<parallel>], iteration_bounds = array<i64: 1>, scalar_prefetch = 0 : i64, scratch_operands = 1 : i64, tpu.core_type = #tpu.core_type<tc>, window_params = [{transform_indices = @transform_0, window_bounds = array<i64: 8, 128>}, {pipeline_mode = #tpu.pipeline_mode<synchronous>, transform_indices = @transform_1, window_bounds = array<i64: 128, 128>}, {pipeline_mode = #tpu.pipeline_mode<synchronous>, transform_indices = @transform_2, window_bounds = array<i64: 2, 128, 128>}, {pipeline_mode = #tpu.pipeline_mode<synchronous>, transform_indices = @transform_3, window_bounds = array<i64: 3, 128>}, {transform_indices = @transform_4, window_bounds = array<i64: 8, 128>}]} {
    %c0 = arith.constant 0 : index
    %c0_0 = arith.constant 0 : index
    %0 = vector.load %arg1[%c0, %c0_0] : memref<8x128xf32, #tpu.memory_space<vmem>>, vector<8x128xf32>
    %1 = arith.truncf %0 : vector<8x128xf32> to vector<8x128xbf16>
    %c0_1 = arith.constant 0 : index
    %c0_2 = arith.constant 0 : index
    %2 = vector.load %arg2[%c0_1, %c0_2] : memref<128x128xbf16, #tpu.memory_space<vmem>>, vector<128x128xbf16>
    %cst = arith.constant dense<0.000000e+00> : vector<8x128xf32>
    %3 = tpu.matmul %1, %2, %cst {dimension_numbers = #tpu.dot_dimension_numbers<[1], [0], [0], [1], [0, 0, 1, 1], [], []>} : vector<8x128xbf16>, vector<128x128xbf16>, vector<8x128xf32> -> vector<8x128xf32>
    %c0_3 = arith.constant 0 : index
    %c0_4 = arith.constant 0 : index
    %4 = vector.load %arg4[%c0_3, %c0_4] : memref<3x128xf32, #tpu.memory_space<vmem>>, vector<1x128xf32>
    %5 = vector.broadcast %4 : vector<1x128xf32> to vector<8x128xf32>
    %6 = arith.addf %3, %5 : vector<8x128xf32>
    %cst_5 = arith.constant 0.000000e+00 : f32
    %7 = vector.broadcast %cst_5 : f32 to vector<8x128xf32>
    %8 = arith.maximumf %6, %7 : vector<8x128xf32>
    %c0_6 = arith.constant 0 : index
    %c0_7 = arith.constant 0 : index
    %9 = vector.load %arg6[%c0_6, %c0_7] : memref<8x128xf32, #tpu.memory_space<vmem>>, vector<8x128xf32>
    tpu.vector_store %arg6[%c0_6, %c0_7], %8 {strides = array<i32>} : memref<8x128xf32, #tpu.memory_space<vmem>>, vector<8x128xf32>,
    %c0_8 = arith.constant 0 : index
    %c0_9 = arith.constant 0 : index
    %10 = vector.load %arg6[%c0_8, %c0_9] : memref<8x128xf32, #tpu.memory_space<vmem>>, vector<8x128xf32>
    %11 = arith.truncf %10 : vector<8x128xf32> to vector<8x128xbf16>
    %c0_10 = arith.constant 0 : index
    %c0_11 = arith.constant 0 : index
    %c0_12 = arith.constant 0 : index
    %12 = vector.load %arg3[%c0_10, %c0_11, %c0_12] : memref<2x128x128xbf16, #tpu.memory_space<vmem>>, vector<1x128x128xbf16>
    %13 = vector.shape_cast %12 : vector<1x128x128xbf16> to vector<128x128xbf16>
    %cst_13 = arith.constant dense<0.000000e+00> : vector<8x128xf32>
    %14 = tpu.matmul %11, %13, %cst_13 {dimension_numbers = #tpu.dot_dimension_numbers<[1], [0], [0], [1], [0, 0, 1, 1], [], []>} : vector<8x128xbf16>, vector<128x128xbf16>, vector<8x128xf32> -> vector<8x128xf32>
    %c1 = arith.constant 1 : index
    %c0_14 = arith.constant 0 : index
    %15 = vector.load %arg4[%c1, %c0_14] : memref<3x128xf32, #tpu.memory_space<vmem>>, vector<1x128xf32>
    %16 = vector.broadcast %15 : vector<1x128xf32> to vector<8x128xf32>
    %17 = arith.addf %14, %16 : vector<8x128xf32>
    %cst_15 = arith.constant 0.000000e+00 : f32
    %18 = vector.broadcast %cst_15 : f32 to vector<8x128xf32>
    %19 = arith.maximumf %17, %18 : vector<8x128xf32>
    %c0_16 = arith.constant 0 : index
    %c0_17 = arith.constant 0 : index
    %20 = vector.load %arg6[%c0_16, %c0_17] : memref<8x128xf32, #tpu.memory_space<vmem>>, vector<8x128xf32>
    tpu.vector_store %arg6[%c0_16, %c0_17], %19 {strides = array<i32>} : memref<8x128xf32, #tpu.memory_space<vmem>>, vector<8x128xf32>,
    %c0_18 = arith.constant 0 : index
    %c0_19 = arith.constant 0 : index
    %21 = vector.load %arg6[%c0_18, %c0_19] : memref<8x128xf32, #tpu.memory_space<vmem>>, vector<8x128xf32>
    %22 = arith.truncf %21 : vector<8x128xf32> to vector<8x128xbf16>
    %c1_20 = arith.constant 1 : index
    %c0_21 = arith.constant 0 : index
    %c0_22 = arith.constant 0 : index
    %23 = vector.load %arg3[%c1_20, %c0_21, %c0_22] : memref<2x128x128xbf16, #tpu.memory_space<vmem>>, vector<1x128x128xbf16>
    %24 = vector.shape_cast %23 : vector<1x128x128xbf16> to vector<128x128xbf16>
    %cst_23 = arith.constant dense<0.000000e+00> : vector<8x128xf32>
    %25 = tpu.matmul %22, %24, %cst_23 {dimension_numbers = #tpu.dot_dimension_numbers<[1], [0], [0], [1], [0, 0, 1, 1], [], []>} : vector<8x128xbf16>, vector<128x128xbf16>, vector<8x128xf32> -> vector<8x128xf32>
    %c2 = arith.constant 2 : index
    %c0_24 = arith.constant 0 : index
    %26 = vector.load %arg4[%c2, %c0_24] : memref<3x128xf32, #tpu.memory_space<vmem>>, vector<1x128xf32>
    %27 = vector.broadcast %26 : vector<1x128xf32> to vector<8x128xf32>
    %28 = arith.addf %25, %27 : vector<8x128xf32>
    %c0_25 = arith.constant 0 : index
    %c0_26 = arith.constant 0 : index
    %29 = vector.load %arg5[%c0_25, %c0_26] : memref<8x128xf32, #tpu.memory_space<vmem>>, vector<8x128xf32>
    tpu.vector_store %arg5[%c0_25, %c0_26], %28 {strides = array<i32>} : memref<8x128xf32, #tpu.memory_space<vmem>>, vector<8x128xf32>,
    return
  }
  func.func @transform_0(%arg0: i32) -> (i32, i32) {
    %c0_i32 = arith.constant 0 : i32
    %c0_i32_0 = arith.constant 0 : i32
    return %arg0, %c0_i32 : i32, i32
  }
  func.func @transform_1(%arg0: i32) -> (i32, i32) {
    %c0_i32 = arith.constant 0 : i32
    %c0_i32_0 = arith.constant 0 : i32
    %c0_i32_1 = arith.constant 0 : i32
    return %c0_i32, %c0_i32_0 : i32, i32
  }
  func.func @transform_2(%arg0: i32) -> (i32, i32, i32) {
    %c0_i32 = arith.constant 0 : i32
    %c0_i32_0 = arith.constant 0 : i32
    %c0_i32_1 = arith.constant 0 : i32
    %c0_i32_2 = arith.constant 0 : i32
    return %c0_i32, %c0_i32_0, %c0_i32_1 : i32, i32, i32
  }
  func.func @transform_3(%arg0: i32) -> (i32, i32) {
    %c0_i32 = arith.constant 0 : i32
    %c0_i32_0 = arith.constant 0 : i32
    %c0_i32_1 = arith.constant 0 : i32
    return %c0_i32, %c0_i32_0 : i32, i32
  }
  func.func @transform_4(%arg0: i32) -> (i32, i32) {
    %c0_i32 = arith.constant 0 : i32
    %c0_i32_0 = arith.constant 0 : i32
    return %arg0, %c0_i32 : i32, i32
  }
}

</mosaic_0001>

<llo_original>
// kernel: tpu_custom_call.1
$region0: #{tpu_custom_call.1}
  #allocation0 [shape = 'u32[]', space=smem, size = 0x4, offset = 0x4, fixed_abs, tag = 'smem constant byte address 0x4 - core index']
  #allocation1 [shape = 'u32[144,128]{1,0:T(1,128)}', space=vmem, size = 0x12000, scoped, tag = 'internal scratch']
  #allocation2 [shape = 'f32[8,128]{1,0:T(8,128)}', space=vmem, size = 0x1000, scoped, tag = 'scratch operand']
  %s0 = inlined_call_operand.hbm [shape: f32[8,128], index: 0, kind: input, shape index: {}]
  %s1 = inlined_call_operand.hbm [shape: bf16[128,128], index: 1, kind: input, shape index: {}]
  %s2 = inlined_call_operand.hbm [shape: bf16[2,128,128], index: 2, kind: input, shape index: {}]
  %s3 = inlined_call_operand.vmem [shape: f32[3,128], index: 3, kind: input, shape index: {}]
  %s4 = inlined_call_operand.hbm [shape: f32[8,128], index: 4, kind: output, shape index: {}]
  %s5 = sld [smem:[#allocation0]]
  $region38: #{tpu_custom_call.1} parent=0
    _
  %s7 = ssub.s32 1, %s5
  %s8 = scalar_select 0, %s7, %s5
  $region1: #{tpu_custom_call.1} parent=0
    #allocation3 [shape = 'u8[4096]{0}', space=vmem, size = 0x1000, scoped, tag = 'input window, operand 0, single buffered']
    #allocation4 [shape = 's32[1]{0}', space=sflag, size = 0x4, scoped, tag = 'scoped memory for tpu_custom_call.1']
    #allocation5 [shape = 's32[1]{0}', space=sflag, size = 0x4, scoped, tag = 'scoped memory for tpu_custom_call.1']
    #allocation6 [shape = 'u8[32768]{0}', space=vmem, size = 0x8000, scoped, tag = 'input window, operand 1, single buffered']
    #allocation7 [shape = 's32[1]{0}', space=sflag, size = 0x4, scoped, tag = 'scoped memory for tpu_custom_call.1']
    #allocation8 [shape = 'u8[65536]{0}', space=vmem, size = 0x10000, scoped, tag = 'input window, operand 2, single buffered']
    #allocation9 [shape = 'u8[4096]{0}', space=vmem, size = 0x1000, scoped, tag = 'output window, operand 0, single buffered']
    %9 = vsyncpa [#allocation4], 0
    %10 = vsyncpa [#allocation7], 0
    %11 = vsyncpa [#allocation5], 0
    // Predicated region
    $region2: #{tpu_custom_call.1} parent=1 // pred_check
      _
    $region3: #{tpu_custom_call.1} parent=1 // pred_check_branch
      %13 = sbr.rel (0) target = $region5
    $region4: #{tpu_custom_call.1} parent=1 // pred_region
      %s15 = ssub.s32 128, 128
      %16 = vsyncadd [#allocation4], %s15
      %s18 = sshll.u32 [#allocation3], 4
      %s19 = int_to_ptr.vmem [resolvable:$true] %s18
      %21 = dma.hbm_to_vmem [thread:$0]  %s0, 128, %s19, [#allocation4]
    $region5: #{tpu_custom_call.1} parent=1 // pred_fallthru
      _
    // Predicated region
    $region6: #{tpu_custom_call.1} parent=1 // pred_check
      _
    $region7: #{tpu_custom_call.1} parent=1 // pred_check_branch
      %23 = sbr.rel (0) target = $region9
    $region8: #{tpu_custom_call.1} parent=1 // pred_region
      %s25 = ssub.s32 1024, 1024
      %26 = vsyncadd [#allocation7], %s25
      %s27 = sshll.u32 [#allocation6], 4
      %s28 = int_to_ptr.vmem [resolvable:$true] %s27
      %33 = dma.hbm_to_vmem [thread:$0]  %s1, 1024, %s28, [#allocation7], 64, 64, 4
    $region9: #{tpu_custom_call.1} parent=1 // pred_fallthru
      _
    // Predicated region
    $region10: #{tpu_custom_call.1} parent=1 // pred_check
      _
    $region11: #{tpu_custom_call.1} parent=1 // pred_check_branch
      %35 = sbr.rel (0) target = $region13
    $region12: #{tpu_custom_call.1} parent=1 // pred_region
      %s37 = ssub.s32 2048, 2048
      %38 = vsyncadd [#allocation7], %s37
      %s39 = sshll.u32 [#allocation8], 4
      %s40 = int_to_ptr.vmem [resolvable:$true] %s39
      %45 = dma.hbm_to_vmem [thread:$0]  %s2, 2048, %s40, [#allocation7], 64, 64, 4
    $region13: #{tpu_custom_call.1} parent=1 // pred_fallthru
      _
    // Predicated region
    $region14: #{tpu_custom_call.1} parent=1 // pred_check
      _
    $region15: #{tpu_custom_call.1} parent=1 // pred_check_branch
      %47 = sbr.rel (0) target = $region17
    $region16: #{tpu_custom_call.1} parent=1 // pred_region
      _
    $region17: #{tpu_custom_call.1} parent=1 // pred_fallthru
      _
    // Predicated region
    $region18: #{tpu_custom_call.1} parent=1 // pred_check
      _
    $region19: #{tpu_custom_call.1} parent=1 // pred_check_branch
      %49 = sbr.rel (0) target = $region21
    $region20: #{tpu_custom_call.1} parent=1 // pred_region
      %50 = dma.done [#allocation4], 128
    $region21: #{tpu_custom_call.1} parent=1 // pred_fallthru
      _
    // Predicated region
    $region22: #{tpu_custom_call.1} parent=1 // pred_check
      _
    $region23: #{tpu_custom_call.1} parent=1 // pred_check_branch
      %52 = sbr.rel (0) target = $region25
    $region24: #{tpu_custom_call.1} parent=1 // pred_region
      %53 = dma.done [#allocation7], 1024
    $region25: #{tpu_custom_call.1} parent=1 // pred_fallthru
      _
    // Predicated region
    $region26: #{tpu_custom_call.1} parent=1 // pred_check
      _
    $region27: #{tpu_custom_call.1} parent=1 // pred_check_branch
      %55 = sbr.rel (0) target = $region29
    $region28: #{tpu_custom_call.1} parent=1 // pred_region
      %56 = dma.done [#allocation7], 2048
    $region29: #{tpu_custom_call.1} parent=1 // pred_fallthru
      _
    %v58 = vld [vmem:[#allocation3] sm:$0xff]
    %v59 = vpack.c.bf16 %v58, %v58
    %v60 = vld [vmem:[#allocation6] sm:$0xf]
    %v61 = vld [vmem:[#allocation6 + $0x4] sm:$0xf]
    %v62 = vld [vmem:[#allocation6 + $0x8] sm:$0xf]
    %v63 = vld [vmem:[#allocation6 + $0xc] sm:$0xf]
    %v64 = vld [vmem:[#allocation6 + $0x10] sm:$0xf]
    %v65 = vld [vmem:[#allocation6 + $0x14] sm:$0xf]
    %v66 = vld [vmem:[#allocation6 + $0x18] sm:$0xf]
    %v67 = vld [vmem:[#allocation6 + $0x1c] sm:$0xf]
    %v68 = vld [vmem:[#allocation6 + $0x20] sm:$0xf]
    %v69 = vld [vmem:[#allocation6 + $0x24] sm:$0xf]
    %v70 = vld [vmem:[#allocation6 + $0x28] sm:$0xf]
    %v71 = vld [vmem:[#allocation6 + $0x2c] sm:$0xf]
    %v72 = vld [vmem:[#allocation6 + $0x30] sm:$0xf]
    %v73 = vld [vmem:[#allocation6 + $0x34] sm:$0xf]
    %v74 = vld [vmem:[#allocation6 + $0x38] sm:$0xf]
    %v75 = vld [vmem:[#allocation6 + $0x3c] sm:$0xf]
    %v76 = vld [vmem:[%s3] sm:$0x1]
    %v77 = vlaneseq
    %v78 = vshrl.u32 %v77, 7
    %v79 = vsub.s32 0, %v78
    %v80 = vrot.slane %v76, %v79
    %v97 = vunpack.c.l.b16 %v60
    %v98 = vunpack.c.l.b16 %v61
    %v99 = vunpack.c.l.b16 %v62
    %v100 = vunpack.c.l.b16 %v63
    %v101 = vunpack.c.l.b16 %v64
    %v102 = vunpack.c.l.b16 %v65
    %v103 = vunpack.c.l.b16 %v66
    %v104 = vunpack.c.l.b16 %v67
    %v105 = vunpack.c.l.b16 %v68
    %v106 = vunpack.c.l.b16 %v69
    %v107 = vunpack.c.l.b16 %v70
    %v108 = vunpack.c.l.b16 %v71
    %v109 = vunpack.c.l.b16 %v72
    %v110 = vunpack.c.l.b16 %v73
    %v111 = vunpack.c.l.b16 %v74
    %v112 = vunpack.c.l.b16 %v75
    %v113 = vpack.c.b16 %v98, %v97
    %v114 = vpack.c.b16 %v100, %v99
    %v115 = vpack.c.b16 %v102, %v101
    %v116 = vpack.c.b16 %v104, %v103
    %v117 = vpack.c.b16 %v106, %v105
    %v118 = vpack.c.b16 %v108, %v107
    %v119 = vpack.c.b16 %v110, %v109
    %v120 = vpack.c.b16 %v112, %v111
    %129 = vmatprep.subr.bf16.mxu0 0
    %130 = vmatpush1.bf16.msra.mxu0 %v120
    %131 = vmatprep.subr.bf16.mxu0 0
    %132 = vmatpush1.bf16.msra.mxu0 %v119
    %133 = vmatprep.subr.bf16.mxu0 0
    %134 = vmatpush1.bf16.msra.mxu0 %v118
    %135 = vmatprep.subr.bf16.mxu0 0
    %136 = vmatpush1.bf16.msra.mxu0 %v117
    %137 = vmatprep.subr.bf16.mxu0 0
    %138 = vmatpush1.bf16.msra.mxu0 %v116
    %139 = vmatprep.subr.bf16.mxu0 0
    %140 = vmatpush1.bf16.msra.mxu0 %v115
    %141 = vmatprep.subr.bf16.mxu0 0
    %142 = vmatpush1.bf16.msra.mxu0 %v114
    %143 = vmatprep.subr.bf16.mxu0 0
    %144 = vmatpush1.bf16.msra.mxu0 %v113
    %145 = vmatprep.subr.bf16.mxu0 0
    %146 = vmatpush2.bf16.msra.mxu0 0
    %147 = vmatprep.subr.bf16.mxu0 0
    %148 = vmatpush2.bf16.msra.mxu0 0
    %149 = vmatprep.subr.bf16.mxu0 0
    %150 = vmatpush2.bf16.msra.mxu0 0
    %151 = vmatprep.subr.bf16.mxu0 0
    %152 = vmatpush2.bf16.msra.mxu0 0
    %153 = vmatprep.subr.bf16.mxu0 0
    %154 = vmatpush2.bf16.msra.mxu0 0
    %155 = vmatprep.subr.bf16.mxu0 0
    %156 = vmatpush2.bf16.msra.mxu0 0
    %157 = vmatprep.subr.bf16.mxu0 0
    %158 = vmatpush2.bf16.msra.mxu0 0
    %159 = vmatprep.subr.bf16.mxu0 0
    %160 = vmatpush2.bf16.msra.mxu0 0
    %161 = vmatprep.mubr.bf16.mxu0 0
    %162 = vmatmul.mubr.bf16.gmra.mxu0 %v59
    %v163 = vpop.f32.mrf.mxu0
    %v164 = vadd.f32 %v80, %v163
    %v165 = vpop.f32.mrf.mxu0
    %v166 = vpop.f32.mrf.mxu0
    %v167 = vpop.f32.mrf.mxu0
    %168 = vdwg.mxu0
    %v169 = vmax.f32 %v164, 0.0
    %170 = vst [vmem:[#allocation2] sm:$0xff] %v169
    %v171 = vld [vmem:[#allocation2] sm:$0xff]
    %v172 = vpack.c.bf16 %v171, %v171
    %v173 = vld [vmem:[#allocation8] sm:$0xf]
    %v174 = vld [vmem:[#allocation8 + $0x4] sm:$0xf]
    %v175 = vld [vmem:[#allocation8 + $0x8] sm:$0xf]
    %v176 = vld [vmem:[#allocation8 + $0xc] sm:$0xf]
    %v177 = vld [vmem:[#allocation8 + $0x10] sm:$0xf]
    %v178 = vld [vmem:[#allocation8 + $0x14] sm:$0xf]
    %v179 = vld [vmem:[#allocation8 + $0x18] sm:$0xf]
    %v180 = vld [vmem:[#allocation8 + $0x1c] sm:$0xf]
    %v181 = vld [vmem:[#allocation8 + $0x20] sm:$0xf]
    %v182 = vld [vmem:[#allocation8 + $0x24] sm:$0xf]
    %v183 = vld [vmem:[#allocation8 + $0x28] sm:$0xf]
    %v184 = vld [vmem:[#allocation8 + $0x2c] sm:$0xf]
    %v185 = vld [vmem:[#allocation8 + $0x30] sm:$0xf]
    %v186 = vld [vmem:[#allocation8 + $0x34] sm:$0xf]
    %v187 = vld [vmem:[#allocation8 + $0x38] sm:$0xf]
    %v188 = vld [vmem:[#allocation8 + $0x3c] sm:$0xf]
    %v189 = vld [vmem:[%s3 + $0x1] sm:$0x1]
    %v190 = vlaneseq
    %v191 = vshrl.u32 %v190, 7
    %v192 = vsub.s32 0, %v191
    %v193 = vrot.slane %v189, %v192
    %v210 = vunpack.c.l.b16 %v173
    %v211 = vunpack.c.l.b16 %v174
    %v212 = vunpack.c.l.b16 %v175
    %v213 = vunpack.c.l.b16 %v176
    %v214 = vunpack.c.l.b16 %v177
    %v215 = vunpack.c.l.b16 %v178
    %v216 = vunpack.c.l.b16 %v179
    %v217 = vunpack.c.l.b16 %v180
    %v218 = vunpack.c.l.b16 %v181
    %v219 = vunpack.c.l.b16 %v182
    %v220 = vunpack.c.l.b16 %v183
    %v221 = vunpack.c.l.b16 %v184
    %v222 = vunpack.c.l.b16 %v185
    %v223 = vunpack.c.l.b16 %v186
    %v224 = vunpack.c.l.b16 %v187
    %v225 = vunpack.c.l.b16 %v188
    %v226 = vpack.c.b16 %v211, %v210
    %v227 = vpack.c.b16 %v213, %v212
    %v228 = vpack.c.b16 %v215, %v214
    %v229 = vpack.c.b16 %v217, %v216
    %v230 = vpack.c.b16 %v219, %v218
    %v231 = vpack.c.b16 %v221, %v220
    %v232 = vpack.c.b16 %v223, %v222
    %v233 = vpack.c.b16 %v225, %v224
    %242 = vmatprep.subr.bf16.mxu0 0
    %243 = vmatpush1.bf16.msra.mxu0 %v233
    %244 = vmatprep.subr.bf16.mxu0 0
    %245 = vmatpush1.bf16.msra.mxu0 %v232
    %246 = vmatprep.subr.bf16.mxu0 0
    %247 = vmatpush1.bf16.msra.mxu0 %v231
    %248 = vmatprep.subr.bf16.mxu0 0
    %249 = vmatpush1.bf16.msra.mxu0 %v230
    %250 = vmatprep.subr.bf16.mxu0 0
    %251 = vmatpush1.bf16.msra.mxu0 %v229
    %252 = vmatprep.subr.bf16.mxu0 0
    %253 = vmatpush1.bf16.msra.mxu0 %v228
    %254 = vmatprep.subr.bf16.mxu0 0
    %255 = vmatpush1.bf16.msra.mxu0 %v227
    %256 = vmatprep.subr.bf16.mxu0 0
    %257 = vmatpush1.bf16.msra.mxu0 %v226
    %258 = vmatprep.subr.bf16.mxu0 0
    %259 = vmatpush2.bf16.msra.mxu0 0
    %260 = vmatprep.subr.bf16.mxu0 0
    %261 = vmatpush2.bf16.msra.mxu0 0
    %262 = vmatprep.subr.bf16.mxu0 0
    %263 = vmatpush2.bf16.msra.mxu0 0
    %264 = vmatprep.subr.bf16.mxu0 0
    %265 = vmatpush2.bf16.msra.mxu0 0
    %266 = vmatprep.subr.bf16.mxu0 0
    %267 = vmatpush2.bf16.msra.mxu0 0
    %268 = vmatprep.subr.bf16.mxu0 0
    %269 = vmatpush2.bf16.msra.mxu0 0
    %270 = vmatprep.subr.bf16.mxu0 0
    %271 = vmatpush2.bf16.msra.mxu0 0
    %272 = vmatprep.subr.bf16.mxu0 0
    %273 = vmatpush2.bf16.msra.mxu0 0
    %274 = vmatprep.mubr.bf16.mxu0 0
    %275 = vmatmul.mubr.bf16.gmra.mxu0 %v172
    %v276 = vpop.f32.mrf.mxu0
    %v277 = vadd.f32 %v193, %v276
    %v278 = vpop.f32.mrf.mxu0
    %v279 = vpop.f32.mrf.mxu0
    %v280 = vpop.f32.mrf.mxu0
    %281 = vdwg.mxu0
    %v282 = vmax.f32 %v277, 0.0
    %283 = vst [vmem:[#allocation2] sm:$0xff] %v282
    %v284 = vld [vmem:[#allocation2] sm:$0xff]
    %v285 = vpack.c.bf16 %v284, %v284
    %s286 = scalar_lea.vmem [#allocation8], 64
    %v287 = vld [vmem:[%s286] sm:$0xf]
    %v288 = vld [vmem:[%s286 + $0x4] sm:$0xf]
    %v289 = vld [vmem:[%s286 + $0x8] sm:$0xf]
    %v290 = vld [vmem:[%s286 + $0xc] sm:$0xf]
    %v291 = vld [vmem:[%s286 + $0x10] sm:$0xf]
    %v292 = vld [vmem:[%s286 + $0x14] sm:$0xf]
    %v293 = vld [vmem:[%s286 + $0x18] sm:$0xf]
    %v294 = vld [vmem:[%s286 + $0x1c] sm:$0xf]
    %v295 = vld [vmem:[%s286 + $0x20] sm:$0xf]
    %v296 = vld [vmem:[%s286 + $0x24] sm:$0xf]
    %v297 = vld [vmem:[%s286 + $0x28] sm:$0xf]
    %v298 = vld [vmem:[%s286 + $0x2c] sm:$0xf]
    %v299 = vld [vmem:[%s286 + $0x30] sm:$0xf]
    %v300 = vld [vmem:[%s286 + $0x34] sm:$0xf]
    %v301 = vld [vmem:[%s286 + $0x38] sm:$0xf]
    %v302 = vld [vmem:[%s286 + $0x3c] sm:$0xf]
    %v303 = vld [vmem:[%s3 + $0x2] sm:$0x1]
    %v304 = vlaneseq
    %v305 = vshrl.u32 %v304, 7
    %v306 = vsub.s32 0, %v305
    %v307 = vrot.slane %v303, %v306
    %v324 = vunpack.c.l.b16 %v287
    %v325 = vunpack.c.l.b16 %v288
    %v326 = vunpack.c.l.b16 %v289
    %v327 = vunpack.c.l.b16 %v290
    %v328 = vunpack.c.l.b16 %v291
    %v329 = vunpack.c.l.b16 %v292
    %v330 = vunpack.c.l.b16 %v293
    %v331 = vunpack.c.l.b16 %v294
    %v332 = vunpack.c.l.b16 %v295
    %v333 = vunpack.c.l.b16 %v296
    %v334 = vunpack.c.l.b16 %v297
    %v335 = vunpack.c.l.b16 %v298
    %v336 = vunpack.c.l.b16 %v299
    %v337 = vunpack.c.l.b16 %v300
    %v338 = vunpack.c.l.b16 %v301
    %v339 = vunpack.c.l.b16 %v302
    %v340 = vpack.c.b16 %v325, %v324
    %v341 = vpack.c.b16 %v327, %v326
    %v342 = vpack.c.b16 %v329, %v328
    %v343 = vpack.c.b16 %v331, %v330
    %v344 = vpack.c.b16 %v333, %v332
    %v345 = vpack.c.b16 %v335, %v334
    %v346 = vpack.c.b16 %v337, %v336
    %v347 = vpack.c.b16 %v339, %v338
    %356 = vmatprep.subr.bf16.mxu0 0
    %357 = vmatpush1.bf16.msra.mxu0 %v347
    %358 = vmatprep.subr.bf16.mxu0 0
    %359 = vmatpush1.bf16.msra.mxu0 %v346
    %360 = vmatprep.subr.bf16.mxu0 0
    %361 = vmatpush1.bf16.msra.mxu0 %v345
    %362 = vmatprep.subr.bf16.mxu0 0
    %363 = vmatpush1.bf16.msra.mxu0 %v344
    %364 = vmatprep.subr.bf16.mxu0 0
    %365 = vmatpush1.bf16.msra.mxu0 %v343
    %366 = vmatprep.subr.bf16.mxu0 0
    %367 = vmatpush1.bf16.msra.mxu0 %v342
    %368 = vmatprep.subr.bf16.mxu0 0
    %369 = vmatpush1.bf16.msra.mxu0 %v341
    %370 = vmatprep.subr.bf16.mxu0 0
    %371 = vmatpush1.bf16.msra.mxu0 %v340
    %372 = vmatprep.subr.bf16.mxu0 0
    %373 = vmatpush2.bf16.msra.mxu0 0
    %374 = vmatprep.subr.bf16.mxu0 0
    %375 = vmatpush2.bf16.msra.mxu0 0
    %376 = vmatprep.subr.bf16.mxu0 0
    %377 = vmatpush2.bf16.msra.mxu0 0
    %378 = vmatprep.subr.bf16.mxu0 0
    %379 = vmatpush2.bf16.msra.mxu0 0
    %380 = vmatprep.subr.bf16.mxu0 0
    %381 = vmatpush2.bf16.msra.mxu0 0
    %382 = vmatprep.subr.bf16.mxu0 0
    %383 = vmatpush2.bf16.msra.mxu0 0
    %384 = vmatprep.subr.bf16.mxu0 0
    %385 = vmatpush2.bf16.msra.mxu0 0
    %386 = vmatprep.subr.bf16.mxu0 0
    %387 = vmatpush2.bf16.msra.mxu0 0
    %388 = vmatprep.mubr.bf16.mxu0 0
    %389 = vmatmul.mubr.bf16.gmra.mxu0 %v285
    %v390 = vpop.f32.mrf.mxu0
    %v391 = vadd.f32 %v307, %v390
    %v392 = vpop.f32.mrf.mxu0
    %v393 = vpop.f32.mrf.mxu0
    %v394 = vpop.f32.mrf.mxu0
    %395 = vdwg.mxu0
    %396 = vst [vmem:[#allocation9] sm:$0xff] %v391
    // Predicated region
    $region30: #{tpu_custom_call.1} parent=1 // pred_check
      _
    $region31: #{tpu_custom_call.1} parent=1 // pred_check_branch
      %398 = sbr.rel (0) target = $region33
    $region32: #{tpu_custom_call.1} parent=1 // pred_region
      %s400 = ssub.s32 128, 128
      %401 = vsyncadd [#allocation5], %s400
      %s403 = sshll.u32 [#allocation9], 4
      %s404 = int_to_ptr.vmem [resolvable:$true] %s403
      %406 = dma.vmem_to_hbm [thread:$0]  %s404, 128, %s4, [#allocation5]
    $region33: #{tpu_custom_call.1} parent=1 // pred_fallthru
      _
    // Predicated region
    $region34: #{tpu_custom_call.1} parent=1 // pred_check
      _
    $region35: #{tpu_custom_call.1} parent=1 // pred_check_branch
      %408 = sbr.rel (0) target = $region37
    $region36: #{tpu_custom_call.1} parent=1 // pred_region
      %409 = dma.done [#allocation5], 128
    $region37: #{tpu_custom_call.1} parent=1 // pred_fallthru
      _
    %410 = vsyncpa [#allocation4], 1
    %411 = vsyncpa [#allocation7], 1
    %412 = vsyncpa [#allocation5], 1

</llo_original>
